<compile_context>
chip_gen: v6e
topology: v6e:2x2x1
jax: 0.10.0
libtpu: 0.0.40
codegen_flags: <defaults>
</compile_context>

<pallas_src>
import jax
import jax.numpy as jnp
from jax.experimental import pallas as pl
from jax.experimental.pallas import tpu as pltpu

_TB_ALIGN = 16  # batch-tile alignment: multiple of 16 keeps bf16 sublane packing aligned


def _round_up(x, m):
    return ((x + m - 1) // m) * m


# --------------------------------------------------------------------------------------
# Kernel A: im2col path (lane-sparse embeddings, E < 128)
# --------------------------------------------------------------------------------------
def textcnn_im2col_kernel(cols_ref, wc_ref, bc_ref, mask_ref, wf_ref, bf_ref, out_ref):
    """Fused conv (3 branches, all taps) + ReLU + max-pool + FC + softmax.

    cols_ref : (TB*Pp, KE)  im2col'd embeddings for TB batch rows (KE = k_max*E)
    wc_ref   : (KE, CP)     packed conv weights (3 branches side by side, lane-padded)
    bc_ref   : (1, CP)      packed conv biases (zeros on pad channels)
    mask_ref : (Pp, CP)     1.0 where (position, channel) is a valid conv output, else 0.0
    wf_ref   : (CP, OP)     packed FC weight (pad rows/cols zero)
    bf_ref   : (1, OP)      FC bias on valid class lanes, -1e30 on pad lanes
    out_ref  : (TB, OP)     softmax probabilities (pad lanes ~0)
    """
    tb, _ = out_ref.shape
    pp, cp = mask_ref.shape

    # One MXU matmul covers every tap of every conv branch for the whole batch tile.
    conv = jnp.dot(cols_ref[...], wc_ref[...],
                   preferred_element_type=jnp.float32)            # (TB*Pp, CP) f32 acc
    act = jnp.maximum(conv + bc_ref[...], 0.0)                    # bias + ReLU (f32 VPU)
    # Zero invalid conv positions (per-branch Lout differences + sublane padding).
    # ReLU output is >= 0, so a multiplicative 0/1 mask preserves the max.
    act = act.reshape(tb, pp, cp) * mask_ref[...][None, :, :]     # tile-aligned reshape
    pooled = jnp.max(act, axis=1)                                 # (TB, CP)  max over time

    # TODO(synk): nn.Dropout is identity at inference time; dropout mask not applied.

    logits = jnp.dot(pooled.astype(wf_ref.dtype), wf_ref[...],
                     preferred_element_type=jnp.float32) + bf_ref[...]   # (TB, OP)

    # softmax over classes (pad lanes carry -1e30 in the folded f32 bias -> exp ~ 0)
    m = jnp.max(logits, axis=-1, keepdims=True)
    e = jnp.exp(logits - m)
    denom = jnp.sum(e, axis=-1, keepdims=True)
    out_ref[...] = (e * pl.reciprocal(denom, approx=True)).astype(out_ref.dtype)


# --------------------------------------------------------------------------------------
# Kernel B: tap-accumulation path (lane-dense embeddings, E >= 128). No im2col
# duplication in HBM: the kernel slices the embedding block along the leading (cheap)
# time axis per tap and accumulates k_max matmuls in f32.
# --------------------------------------------------------------------------------------
def textcnn_tap_kernel(emb_ref, wc_ref, bc_ref, mask_ref, wf_ref, bf_ref, out_ref):
    """emb_ref  : (Lpad, TB, Ep)   zero-padded embeddings, time-major (natural gather layout)
       wc_ref   : (k_max, Ep, CP)  per-tap packed conv weights
       bc_ref   : (1, CP)
       mask_ref : (Pp, CP)
       wf_ref   : (CP, OP)
       bf_ref   : (1, OP)          f32; -1e30 on pad class lanes
       out_ref  : (TB, OP)
    """
    tb, _ = out_ref.shape
    pp, cp = mask_ref.shape
    k_max = wc_ref.shape[0]
    ep = wc_ref.shape[1]

    emb = emb_ref[...]                                            # (Lpad, TB, Ep)
    acc = jnp.zeros((pp * tb, cp), jnp.float32)
    for j in range(k_max):                                        # tiny static unroll (3-5)
        x_j = emb[j:j + pp].reshape(pp * tb, ep)                  # leading-dim slice: cheap
        acc = acc + jnp.dot(x_j, wc_ref[j], preferred_element_type=jnp.float32)

    act = jnp.maximum(acc + bc_ref[...], 0.0)                     # bias + ReLU (f32)
    act = act.reshape(pp, tb, cp) * mask_ref[...][:, None, :]     # mask after ReLU (>=0)
    pooled = jnp.max(act, axis=0)                                 # (TB, CP) max over time

    # TODO(synk): nn.Dropout is identity at inference time; dropout mask not applied.

    logits = jnp.dot(pooled.astype(wf_ref.dtype), wf_ref[...],
                     preferred_element_type=jnp.float32) + bf_ref[...]

    m = jnp.max(logits, axis=-1, keepdims=True)
    e = jnp.exp(logits - m)
    denom = jnp.sum(e, axis=-1, keepdims=True)
    out_ref[...] = (e * pl.reciprocal(denom, approx=True)).astype(out_ref.dtype)


# --------------------------------------------------------------------------------------
# One-time parameter packing (hoisted out of the forward path).
# --------------------------------------------------------------------------------------
def pack_textcnn_params(params, max_sen_len, *, compute_dtype=jnp.bfloat16, use_im2col=None):
    emb_table = params["embeddings"]
    E = int(emb_table.shape[1])
    branches = ((params["w1"], params["b1"]),
                (params["w2"], params["b2"]),
                (params["w3"], params["b3"]))
    ks = tuple(int(w.shape[2]) for w, _ in branches)
    k_min, k_max = min(ks), max(ks)
    C = int(branches[0][0].shape[0])
    O = int(params["wf"].shape[0])
    L = int(max_sen_len)

    P = L - k_min + 1                        # longest conv output length
    Pp = _round_up(P, 8)                     # sublane pad -> tile-aligned in-kernel reshape
    CP = _round_up(max(3 * C, 128), 128)     # packed conv channels, lane-dense
    OP = _round_up(max(O, 128), 128)         # packed classes, lane-dense output
    if use_im2col is None:
        use_im2col = E < 128                 # lane-sparse embeddings -> im2col path
    Ep = E if use_im2col else _round_up(E, 128)
    KE = k_max * E
    Lpad = Pp + k_max - 1

    bc = jnp.zeros((1, CP), jnp.float32)
    mask = jnp.zeros((Pp, CP), jnp.float32)
    wc = (jnp.zeros((KE, CP), jnp.float32) if use_im2col
          else jnp.zeros((k_max, Ep, CP), jnp.float32))
    for m, (wk, bk) in enumerate(branches):              # wk: (C, E, k) PyTorch layout
        k = int(wk.shape[2])
        wt = jnp.transpose(wk, (2, 1, 0))                # tap-major (k, E, C)
        if use_im2col:
            wc = wc.at[:k * E, m * C:(m + 1) * C].set(wt.reshape(k * E, C))
        else:
            wc = wc.at[:k, :E, m * C:(m + 1) * C].set(wt)
        bc = bc.at[0, m * C:(m + 1) * C].set(bk)
        mask = mask.at[:L - k + 1, m * C:(m + 1) * C].set(1.0)   # valid conv positions

    # FC weight/bias; softmax pad-lane mask folded into the bias (-1e30 on pad lanes).
    wf = jnp.zeros((CP, OP), jnp.float32).at[:3 * C, :O].set(params["wf"].T)
    bf = jnp.full((1, OP), -1e30, jnp.float32).at[0, :O].set(params["bf"])
    # NOTE: bf stays float32 (pad sentinel); never cast it to the compute dtype.

    return dict(
        emb_table=emb_table.astype(compute_dtype),
        wc=wc.astype(compute_dtype), bc=bc, mask=mask,
        wf=wf.astype(compute_dtype), bf=bf,
        compute_dtype=compute_dtype, use_im2col=use_im2col,
        L=L, E=E, Ep=Ep, KE=KE, Lpad=Lpad, C=C, O=O,
        k_min=k_min, k_max=k_max, Pp=Pp, CP=CP, OP=OP,
    )


# --------------------------------------------------------------------------------------
# Forward pass
# --------------------------------------------------------------------------------------
def textcnn_forward(x_tokens, packed, *, batch_tile=256, input_buffering=2):
    """x_tokens: (max_sen_len, batch) int32 token ids (PyTorch's batch.text layout)."""
    L, B = x_tokens.shape
    assert L == packed["L"], "x_tokens length must match packed max_sen_len"
    cdt = packed["compute_dtype"]
    Pp, CP, OP, O, k_max = packed["Pp"], packed["CP"], packed["OP"], packed["O"], packed["k_max"]
    wc, bc, mask, wf, bf = packed["wc"], packed["bc"], packed["mask"], packed["wf"], packed["bf"]
    itemsize = jnp.dtype(cdt).itemsize

    # --- batch tiling: large M per grid step, >= 2 steps when batch allows (v7x megacore) --
    TB = min(_round_up(max(int(batch_tile), _TB_ALIGN), _TB_ALIGN), _round_up(B, _TB_ALIGN))
    if _round_up(B, TB) // TB < 2 and B >= 2 * _TB_ALIGN:
        TB = _round_up((B + 1) // 2, _TB_ALIGN)
    Bp = _round_up(B, TB)

    # --- embedding lookup (on the compute-dtype table packed once at load time) ------------
    # TODO(synk): for very large vocab/E, move this gather into the kernel via
    # PrefetchScalarGridSpec-prefetched token ids + per-tile DMA gather so the activation
    # never round-trips HBM between XLA and the kernel.
    emb = jnp.take(packed["emb_table"], x_tokens, axis=0)        # (L, B, E), compute dtype

    if packed["use_im2col"]:
        # lane-sparse E (< 128): im2col so one MXU matmul covers all taps of all branches
        E, KE = packed["E"], packed["KE"]
        emb = jnp.transpose(emb, (1, 0, 2))                       # (B, L, E) channels-last
        if Bp != B:
            emb = jnp.concatenate([emb, jnp.zeros((Bp - B, L, E), emb.dtype)], axis=0)
        pad_len = Pp + k_max - 1 - L
        if pad_len > 0:
            emb = jnp.concatenate([emb, jnp.zeros((Bp, pad_len, E), emb.dtype)], axis=1)
        cols = jnp.concatenate([emb[:, j:j + Pp, :] for j in range(k_max)], axis=-1)
        cols = cols.reshape(Bp * Pp, KE)                          # (Bp*Pp, k_max*E)

        if input_buffering != 2:
            stream_spec = pl.BlockSpec((TB * Pp, KE), lambda i: (i, 0),
                                       pipeline_mode=pl.Buffered(input_buffering))
        else:
            stream_spec = pl.BlockSpec((TB * Pp, KE), lambda i: (i, 0))
        in_specs = [
            stream_spec,                                          # streamed batch tile
            pl.BlockSpec((KE, CP), lambda i: (0, 0)),             # resident conv weights
            pl.BlockSpec((1, CP), lambda i: (0, 0)),              # conv bias
            pl.BlockSpec((Pp, CP), lambda i: (0, 0)),             # valid-position mask
            pl.BlockSpec((CP, OP), lambda i: (0, 0)),             # FC weight
            pl.BlockSpec((1, OP), lambda i: (0, 0)),              # FC bias + pad-lane mask
        ]
        kernel = textcnn_im2col_kernel
        args = (cols, wc, bc, mask, wf, bf)
        tile_bytes = TB * Pp * KE * itemsize
    else:
        # lane-dense E (>= 128): no k_max-fold im2col duplication; kernel accumulates taps.
        E, Ep, Lpad = packed["E"], packed["Ep"], packed["Lpad"]
        emb = jnp.pad(emb, ((0, Lpad - L), (0, Bp - B), (0, Ep - E)))   # (Lpad, Bp, Ep)

        if input_buffering != 2:
            stream_spec = pl.BlockSpec((Lpad, TB, Ep), lambda i: (0, i, 0),
                                       pipeline_mode=pl.Buffered(input_buffering))
        else:
            stream_spec = pl.BlockSpec((Lpad, TB, Ep), lambda i: (0, i, 0))
        in_specs = [
            stream_spec,                                          # streamed batch tile
            pl.BlockSpec((k_max, Ep, CP), lambda i: (0, 0, 0)),   # per-tap conv weights
            pl.BlockSpec((1, CP), lambda i: (0, 0)),
            pl.BlockSpec((Pp, CP), lambda i: (0, 0)),
            pl.BlockSpec((CP, OP), lambda i: (0, 0)),
            pl.BlockSpec((1, OP), lambda i: (0, 0)),
        ]
        kernel = textcnn_tap_kernel
        args = (emb, wc, bc, mask, wf, bf)
        tile_bytes = Lpad * TB * Ep * itemsize

    # --- VMEM budget: raise the scoped limit only when the double-buffered stream needs it.
    # (v5e default scoped limit is 16 MiB; v7x physical per-TC VMEM is 64 MiB.)
    resident_bytes = (wc.size + wf.size) * itemsize + (bc.size + mask.size + bf.size) * 4
    need = 2 * tile_bytes + resident_bytes + 2 * TB * OP * 4 + (2 << 20)
    compiler_kwargs = dict(dimension_semantics=("parallel",))
    if need > (12 << 20):
        compiler_kwargs["vmem_limit_bytes"] = int(min(need * 5 // 4, 64 << 20))

    out = pl.pallas_call(
        kernel,
        out_shape=jax.ShapeDtypeStruct((Bp, OP), jnp.float32),
        grid=(Bp // TB,),
        in_specs=in_specs,
        out_specs=pl.BlockSpec((TB, OP), lambda i: (i, 0)),       # lane-dense (OP = 128)
        compiler_params=pltpu.CompilerParams(**compiler_kwargs),
    )(*args)
    return out[:B, :O]                                            # (B, O)


# --------------------------------------------------------------------------------------
# Pure-JAX reference mirroring the PyTorch forward exactly.
# --------------------------------------------------------------------------------------
def textcnn_reference(x_tokens, params):
    emb = jnp.take(params["embeddings"], x_tokens, axis=0)        # (L, B, E)
    emb = jnp.transpose(emb, (1, 0, 2))                           # (B, L, E)
    feats = []
    for wk, bk in ((params["w1"], params["b1"]),
                   (params["w2"], params["b2"]),
                   (params["w3"], params["b3"])):
        C, E, k = wk.shape
        L = emb.shape[1]
        Lout = L - k + 1
        acc = jnp.zeros((emb.shape[0], Lout, C), jnp.float32)
        for j in range(k):
            acc = acc + jnp.einsum("ble,ce->blc", emb[:, j:j + Lout, :], wk[:, :, j])
        acc = jnp.maximum(acc + bk[None, None, :], 0.0)
        feats.append(jnp.max(acc, axis=1))                        # (B, C)
    allf = jnp.concatenate(feats, axis=1)                         # (B, 3C)
    logits = allf @ params["wf"].T + params["bf"]
    return jax.nn.softmax(logits, axis=1)


if __name__ == "__main__":
    def make_params(key, V, E, C, O, KS):
        ks = jax.random.split(key, 10)
        params = {
            "embeddings": jax.random.normal(ks[0], (V, E), jnp.float32),
            "w1": 0.1 * jax.random.normal(ks[1], (C, E, KS[0]), jnp.float32),
            "b1": 0.1 * jax.random.normal(ks[2], (C,), jnp.float32),
            "w2": 0.1 * jax.random.normal(ks[3], (C, E, KS[1]), jnp.float32),
            "b2": 0.1 * jax.random.normal(ks[4], (C,), jnp.float32),
            "w3": 0.1 * jax.random.normal(ks[5], (C, E, KS[2]), jnp.float32),
            "b3": 0.1 * jax.random.normal(ks[6], (C,), jnp.float32),
            "wf": 0.1 * jax.random.normal(ks[7], (O, 3 * C), jnp.float32),
            "bf": 0.1 * jax.random.normal(ks[8], (O,), jnp.float32),
        }
        return params, ks[9]

    KS = (3, 4, 5)
    key = jax.random.PRNGKey(0)
    k1, k2 = jax.random.split(key)

    # ---- Config 1: lane-sparse embeddings (E=32) -> im2col kernel path -------------------
    V1, E1, C1, O1, L1, B1 = 50, 32, 8, 4, 16, 2
    params1, xk1 = make_params(k1, V1, E1, C1, O1, KS)
    x1 = jax.random.randint(xk1, (L1, B1), 0, V1, dtype=jnp.int32)   # (max_sen_len, batch)
    ref1 = jax.block_until_ready(textcnn_reference(x1, params1))

    packed1_f32 = pack_textcnn_params(params1, L1, compute_dtype=jnp.float32)
    out1_f32 = jax.block_until_ready(textcnn_forward(x1, packed1_f32))
    assert out1_f32.shape == (B1, O1)
    assert jnp.allclose(out1_f32, ref1, atol=1e-3, rtol=1e-3), (out1_f32, ref1)

    packed1_bf16 = pack_textcnn_params(params1, L1)                   # bf16 default
    out1_bf16 = jax.block_until_ready(textcnn_forward(x1, packed1_bf16))
    assert out1_bf16.shape == (B1, O1)
    assert jnp.allclose(out1_bf16, ref1, atol=5e-2, rtol=5e-2), (out1_bf16, ref1)

    # ---- Config 2: lane-dense embeddings (E=128) -> in-kernel tap accumulation, ----------
    # ---- batch 40 exercises the multi-step grid (two batch tiles, padded rows) -----------
    V2, E2, C2, O2, L2, B2 = 50, 128, 8, 4, 16, 40
    params2, xk2 = make_params(k2, V2, E2, C2, O2, KS)
    x2 = jax.random.randint(xk2, (L2, B2), 0, V2, dtype=jnp.int32)
    ref2 = jax.block_until_ready(textcnn_reference(x2, params2))

    packed2_f32 = pack_textcnn_params(params2, L2, compute_dtype=jnp.float32)
    out2_f32 = jax.block_until_ready(textcnn_forward(x2, packed2_f32))
    assert out2_f32.shape == (B2, O2)
    assert jnp.allclose(out2_f32, ref2, atol=1e-3, rtol=1e-3), (out2_f32, ref2)

    packed2_bf16 = pack_textcnn_params(params2, L2)
    out2_bf16 = jax.block_until_ready(textcnn_forward(x2, packed2_bf16))
    assert out2_bf16.shape == (B2, O2)
    assert jnp.allclose(out2_bf16, ref2, atol=5e-2, rtol=5e-2), (out2_bf16, ref2)

    print("KERNEL_OK")
</pallas_src>

<mosaic_0001>
module attributes {stable_mosaic.version = 11 : i64} {
  func.func @textcnn_im2col_kernel(%arg0: i32, %arg1: memref<256x160xf32, #tpu.memory_space<vmem>>, %arg2: memref<160x128xf32, #tpu.memory_space<vmem>>, %arg3: memref<1x128xf32, #tpu.memory_space<vmem>>, %arg4: memref<16x128xf32, #tpu.memory_space<vmem>>, %arg5: memref<128x128xf32, #tpu.memory_space<vmem>>, %arg6: memref<1x128xf32, #tpu.memory_space<vmem>>, %arg7: memref<16x128xf32, #tpu.memory_space<vmem>>) attributes {dimension_semantics = [#tpu.dimension_semantics<parallel>], iteration_bounds = array<i64: 1>, scalar_prefetch = 0 : i64, scratch_operands = 0 : i64, tpu.core_type = #tpu.core_type<tc>, window_params = [{transform_indices = @transform_0, window_bounds = array<i64: 256, 160>}, {pipeline_mode = #tpu.pipeline_mode<synchronous>, transform_indices = @transform_1, window_bounds = array<i64: 160, 128>}, {pipeline_mode = #tpu.pipeline_mode<synchronous>, transform_indices = @transform_2, window_bounds = array<i64: 1, 128>}, {pipeline_mode = #tpu.pipeline_mode<synchronous>, transform_indices = @transform_3, window_bounds = array<i64: 16, 128>}, {pipeline_mode = #tpu.pipeline_mode<synchronous>, transform_indices = @transform_4, window_bounds = array<i64: 128, 128>}, {pipeline_mode = #tpu.pipeline_mode<synchronous>, transform_indices = @transform_5, window_bounds = array<i64: 1, 128>}, {transform_indices = @transform_6, window_bounds = array<i64: 16, 128>}]} {
    %c0 = arith.constant 0 : index
    %c0_0 = arith.constant 0 : index
    %0 = vector.load %arg1[%c0, %c0_0] : memref<256x160xf32, #tpu.memory_space<vmem>>, vector<256x160xf32>
    %c0_1 = arith.constant 0 : index
    %c0_2 = arith.constant 0 : index
    %1 = vector.load %arg2[%c0_1, %c0_2] : memref<160x128xf32, #tpu.memory_space<vmem>>, vector<160x128xf32>
    %cst = arith.constant dense<0.000000e+00> : vector<256x128xf32>
    %2 = tpu.matmul %0, %1, %cst {dimension_numbers = #tpu.dot_dimension_numbers<[1], [0], [0], [1], [0, 0, 1, 1], [], []>} : vector<256x160xf32>, vector<160x128xf32>, vector<256x128xf32> -> vector<256x128xf32>
    %c0_3 = arith.constant 0 : index
    %c0_4 = arith.constant 0 : index
    %3 = vector.load %arg3[%c0_3, %c0_4] : memref<1x128xf32, #tpu.memory_space<vmem>>, vector<1x128xf32>
    %4 = vector.broadcast %3 : vector<1x128xf32> to vector<256x128xf32>
    %5 = arith.addf %2, %4 : vector<256x128xf32>
    %cst_5 = arith.constant 0.000000e+00 : f32
    %6 = vector.broadcast %cst_5 : f32 to vector<256x128xf32>
    %7 = arith.maximumf %5, %6 : vector<256x128xf32>
    %8 = vector.shape_cast %7 : vector<256x128xf32> to vector<16x16x128xf32>
    %c0_6 = arith.constant 0 : index
    %c0_7 = arith.constant 0 : index
    %9 = vector.load %arg4[%c0_6, %c0_7] : memref<16x128xf32, #tpu.memory_space<vmem>>, vector<16x128xf32>
    %10 = vector.shape_cast %9 : vector<16x128xf32> to vector<1x16x128xf32>
    %11 = vector.broadcast %10 : vector<1x16x128xf32> to vector<16x16x128xf32>
    %12 = arith.mulf %8, %11 : vector<16x16x128xf32>
    %cst_8 = arith.constant dense<0xFF800000> : vector<16x128xf32>
    %13 = vector.multi_reduction <maximumf>, %12, %cst_8 [1] : vector<16x16x128xf32> to vector<16x128xf32>
    %c0_9 = arith.constant 0 : index
    %c0_10 = arith.constant 0 : index
    %14 = vector.load %arg5[%c0_9, %c0_10] : memref<128x128xf32, #tpu.memory_space<vmem>>, vector<128x128xf32>
    %cst_11 = arith.constant dense<0.000000e+00> : vector<16x128xf32>
    %15 = tpu.matmul %13, %14, %cst_11 {dimension_numbers = #tpu.dot_dimension_numbers<[1], [0], [0], [1], [0, 0, 1, 1], [], []>} : vector<16x128xf32>, vector<128x128xf32>, vector<16x128xf32> -> vector<16x128xf32>
    %c0_12 = arith.constant 0 : index
    %c0_13 = arith.constant 0 : index
    %16 = vector.load %arg6[%c0_12, %c0_13] : memref<1x128xf32, #tpu.memory_space<vmem>>, vector<1x128xf32>
    %17 = vector.broadcast %16 : vector<1x128xf32> to vector<16x128xf32>
    %18 = arith.addf %15, %17 : vector<16x128xf32>
    %cst_14 = arith.constant dense<0xFF800000> : vector<16xf32>
    %19 = vector.multi_reduction <maximumf>, %18, %cst_14 [1] : vector<16x128xf32> to vector<16xf32>
    %20 = vector.shape_cast %19 : vector<16xf32> to vector<16x1xf32>
    %21 = vector.broadcast %20 : vector<16x1xf32> to vector<16x128xf32>
    %22 = arith.subf %18, %21 : vector<16x128xf32>
    %23 = math.exp %22 : vector<16x128xf32>
    %cst_15 = arith.constant dense<0.000000e+00> : vector<16xf32>
    %24 = vector.multi_reduction <add>, %23, %cst_15 [1] : vector<16x128xf32> to vector<16xf32>
    %25 = vector.shape_cast %24 : vector<16xf32> to vector<16x1xf32>
    %26 = tpu.reciprocal %25 {approx = true} : vector<16x1xf32> -> vector<16x1xf32>
    %27 = vector.broadcast %26 : vector<16x1xf32> to vector<16x128xf32>
    %28 = arith.mulf %23, %27 : vector<16x128xf32>
    %c0_16 = arith.constant 0 : index
    %c0_17 = arith.constant 0 : index
    %29 = vector.load %arg7[%c0_16, %c0_17] : memref<16x128xf32, #tpu.memory_space<vmem>>, vector<16x128xf32>
    tpu.vector_store %arg7[%c0_16, %c0_17], %28 {strides = array<i32>} : memref<16x128xf32, #tpu.memory_space<vmem>>, vector<16x128xf32>,
    return
  }
  func.func @transform_0(%arg0: i32) -> (i32, i32) {
    %c0_i32 = arith.constant 0 : i32
    %c0_i32_0 = arith.constant 0 : i32
    return %arg0, %c0_i32 : i32, i32
  }
  func.func @transform_1(%arg0: i32) -> (i32, i32) {
    %c0_i32 = arith.constant 0 : i32
    %c0_i32_0 = arith.constant 0 : i32
    %c0_i32_1 = arith.constant 0 : i32
    return %c0_i32, %c0_i32_0 : i32, i32
  }
  func.func @transform_2(%arg0: i32) -> (i32, i32) {
    %c0_i32 = arith.constant 0 : i32
    %c0_i32_0 = arith.constant 0 : i32
    %c0_i32_1 = arith.constant 0 : i32
    return %c0_i32, %c0_i32_0 : i32, i32
  }
  func.func @transform_3(%arg0: i32) -> (i32, i32) {
    %c0_i32 = arith.constant 0 : i32
    %c0_i32_0 = arith.constant 0 : i32
    %c0_i32_1 = arith.constant 0 : i32
    return %c0_i32, %c0_i32_0 : i32, i32
  }
  func.func @transform_4(%arg0: i32) -> (i32, i32) {
    %c0_i32 = arith.constant 0 : i32
    %c0_i32_0 = arith.constant 0 : i32
    %c0_i32_1 = arith.constant 0 : i32
    return %c0_i32, %c0_i32_0 : i32, i32
  }
  func.func @transform_5(%arg0: i32) -> (i32, i32) {
    %c0_i32 = arith.constant 0 : i32
    %c0_i32_0 = arith.constant 0 : i32
    %c0_i32_1 = arith.constant 0 : i32
    return %c0_i32, %c0_i32_0 : i32, i32
  }
  func.func @transform_6(%arg0: i32) -> (i32, i32) {
    %c0_i32 = arith.constant 0 : i32
    %c0_i32_0 = arith.constant 0 : i32
    return %arg0, %c0_i32 : i32, i32
  }
}

</mosaic_0001>

<llo_original>
// kernel: tpu_custom_call.1
$region0: #{tpu_custom_call.1}
  #allocation0 [shape = 'u32[]', space=smem, size = 0x4, offset = 0x4, fixed_abs, tag = 'smem constant byte address 0x4 - core index']
  #allocation1 [shape = 'u32[144,128]{1,0:T(1,128)}', space=vmem, size = 0x12000, scoped, tag = 'internal scratch']
  %s0 = inlined_call_operand.vmem [shape: f32[256,160], index: 0, kind: input, shape index: {}]
  %s1 = inlined_call_operand.vmem [shape: f32[160,128], index: 1, kind: input, shape index: {}]
  %s2 = inlined_call_operand.vmem [shape: f32[1,128], index: 2, kind: input, shape index: {}]
  %s3 = inlined_call_operand.vmem [shape: f32[16,128], index: 3, kind: input, shape index: {}]
  %s4 = inlined_call_operand.vmem [shape: f32[128,128], index: 4, kind: input, shape index: {}]
  %s5 = inlined_call_operand.vmem [shape: f32[1,128], index: 5, kind: input, shape index: {}]
  %s6 = inlined_call_operand.hbm [shape: f32[16,128], index: 6, kind: output, shape index: {}]
  %s7 = sld [smem:[#allocation0]]
  $region34: #{tpu_custom_call.1} parent=0
    _
  %s9 = ssub.s32 1, %s7
  %s10 = scalar_select 0, %s9, %s7
  $region1: #{tpu_custom_call.1} parent=0
    #allocation2 [shape = 'u8[8192]{0}', space=vmem, size = 0x2000, scoped, tag = 'output window, operand 0, single buffered']
    #allocation3 [shape = 's32[1]{0}', space=sflag, size = 0x4, scoped, tag = 'scoped memory for tpu_custom_call.1']
    %11 = vsyncpa [#allocation3], 0
    // Predicated region
    $region2: #{tpu_custom_call.1} parent=1 // pred_check
      _
    $region3: #{tpu_custom_call.1} parent=1 // pred_check_branch
      %13 = sbr.rel (0) target = $region5
    $region4: #{tpu_custom_call.1} parent=1 // pred_region
      _
    $region5: #{tpu_custom_call.1} parent=1 // pred_fallthru
      _
    // Predicated region
    $region6: #{tpu_custom_call.1} parent=1 // pred_check
      _
    $region7: #{tpu_custom_call.1} parent=1 // pred_check_branch
      %15 = sbr.rel (0) target = $region9
    $region8: #{tpu_custom_call.1} parent=1 // pred_region
      _
    $region9: #{tpu_custom_call.1} parent=1 // pred_fallthru
      _
    // Predicated region
    $region10: #{tpu_custom_call.1} parent=1 // pred_check
      _
    $region11: #{tpu_custom_call.1} parent=1 // pred_check_branch
      %17 = sbr.rel (0) target = $region13
    $region12: #{tpu_custom_call.1} parent=1 // pred_region
      _
    $region13: #{tpu_custom_call.1} parent=1 // pred_fallthru
      _
    // Predicated region
    $region14: #{tpu_custom_call.1} parent=1 // pred_check
      _
    $region15: #{tpu_custom_call.1} parent=1 // pred_check_branch
      %19 = sbr.rel (0) target = $region17
    $region16: #{tpu_custom_call.1} parent=1 // pred_region
      _
    $region17: #{tpu_custom_call.1} parent=1 // pred_fallthru
      _
    // Predicated region
    $region18: #{tpu_custom_call.1} parent=1 // pred_check
      _
    $region19: #{tpu_custom_call.1} parent=1 // pred_check_branch
      %21 = sbr.rel (0) target = $region21
    $region20: #{tpu_custom_call.1} parent=1 // pred_region
      _
    $region21: #{tpu_custom_call.1} parent=1 // pred_fallthru
      _
    // Predicated region
    $region22: #{tpu_custom_call.1} parent=1 // pred_check
      _
    $region23: #{tpu_custom_call.1} parent=1 // pred_check_branch
      %23 = sbr.rel (0) target = $region25
    $region24: #{tpu_custom_call.1} parent=1 // pred_region
      _
    $region25: #{tpu_custom_call.1} parent=1 // pred_fallthru
      _
    %v24 = vld [vmem:[%s0] sm:$0xff]
    %v25 = vld [vmem:[%s0 + $0x8] sm:$0xff]
    %v26 = vld [vmem:[%s0 + $0x10] sm:$0xff]
    %v27 = vld [vmem:[%s0 + $0x18] sm:$0xff]
    %v28 = vld [vmem:[%s0 + $0x20] sm:$0xff]
    %v29 = vld [vmem:[%s0 + $0x28] sm:$0xff]
    %v30 = vld [vmem:[%s0 + $0x30] sm:$0xff]
    %v31 = vld [vmem:[%s0 + $0x38] sm:$0xff]
    %v32 = vld [vmem:[%s0 + $0x40] sm:$0xff]
    %v33 = vld [vmem:[%s0 + $0x48] sm:$0xff]
    %v34 = vld [vmem:[%s0 + $0x50] sm:$0xff]
    %v35 = vld [vmem:[%s0 + $0x58] sm:$0xff]
    %v36 = vld [vmem:[%s0 + $0x60] sm:$0xff]
    %v37 = vld [vmem:[%s0 + $0x68] sm:$0xff]
    %v38 = vld [vmem:[%s0 + $0x70] sm:$0xff]
    %v39 = vld [vmem:[%s0 + $0x78] sm:$0xff]
    %v40 = vld [vmem:[%s0 + $0x80] sm:$0xff]
    %v41 = vld [vmem:[%s0 + $0x88] sm:$0xff]
    %v42 = vld [vmem:[%s0 + $0x90] sm:$0xff]
    %v43 = vld [vmem:[%s0 + $0x98] sm:$0xff]
    %v44 = vld [vmem:[%s0 + $0xa0] sm:$0xff]
    %v45 = vld [vmem:[%s0 + $0xa8] sm:$0xff]
    %v46 = vld [vmem:[%s0 + $0xb0] sm:$0xff]
    %v47 = vld [vmem:[%s0 + $0xb8] sm:$0xff]
    %v48 = vld [vmem:[%s0 + $0xc0] sm:$0xff]
    %v49 = vld [vmem:[%s0 + $0xc8] sm:$0xff]
    %v50 = vld [vmem:[%s0 + $0xd0] sm:$0xff]
    %v51 = vld [vmem:[%s0 + $0xd8] sm:$0xff]
    %v52 = vld [vmem:[%s0 + $0xe0] sm:$0xff]
    %v53 = vld [vmem:[%s0 + $0xe8] sm:$0xff]
    %v54 = vld [vmem:[%s0 + $0xf0] sm:$0xff]
    %v55 = vld [vmem:[%s0 + $0xf8] sm:$0xff]
    %v56 = vld [vmem:[%s0 + $0x100] sm:$0xff]
    %v57 = vld [vmem:[%s0 + $0x108] sm:$0xff]
    %v58 = vld [vmem:[%s0 + $0x110] sm:$0xff]
    %v59 = vld [vmem:[%s0 + $0x118] sm:$0xff]
    %v60 = vld [vmem:[%s0 + $0x120] sm:$0xff]
    %v61 = vld [vmem:[%s0 + $0x128] sm:$0xff]
    %v62 = vld [vmem:[%s0 + $0x130] sm:$0xff]
    %v63 = vld [vmem:[%s0 + $0x138] sm:$0xff]
    %v64 = vld [vmem:[%s0 + $0x140] sm:$0xff]
    %v65 = vld [vmem:[%s0 + $0x148] sm:$0xff]
    %v66 = vld [vmem:[%s0 + $0x150] sm:$0xff]
    %v67 = vld [vmem:[%s0 + $0x158] sm:$0xff]
    %v68 = vld [vmem:[%s0 + $0x160] sm:$0xff]
    %v69 = vld [vmem:[%s0 + $0x168] sm:$0xff]
    %v70 = vld [vmem:[%s0 + $0x170] sm:$0xff]
    %v71 = vld [vmem:[%s0 + $0x178] sm:$0xff]
    %v72 = vld [vmem:[%s0 + $0x180] sm:$0xff]
    %v73 = vld [vmem:[%s0 + $0x188] sm:$0xff]
    %v74 = vld [vmem:[%s0 + $0x190] sm:$0xff]
    %v75 = vld [vmem:[%s0 + $0x198] sm:$0xff]
    %v76 = vld [vmem:[%s0 + $0x1a0] sm:$0xff]
    %v77 = vld [vmem:[%s0 + $0x1a8] sm:$0xff]
    %v78 = vld [vmem:[%s0 + $0x1b0] sm:$0xff]
    %v79 = vld [vmem:[%s0 + $0x1b8] sm:$0xff]
    %v80 = vld [vmem:[%s0 + $0x1c0] sm:$0xff]
    %v81 = vld [vmem:[%s0 + $0x1c8] sm:$0xff]
    %v82 = vld [vmem:[%s0 + $0x1d0] sm:$0xff]
    %v83 = vld [vmem:[%s0 + $0x1d8] sm:$0xff]
    %v84 = vld [vmem:[%s0 + $0x1e0] sm:$0xff]
    %v85 = vld [vmem:[%s0 + $0x1e8] sm:$0xff]
    %v86 = vld [vmem:[%s0 + $0x1f0] sm:$0xff]
    %v87 = vld [vmem:[%s0 + $0x1f8] sm:$0xff]
    %v88 = vld [vmem:[%s1] sm:$0xff]
    %v89 = vld [vmem:[%s1 + $0x8] sm:$0xff]
    %v90 = vld [vmem:[%s1 + $0x10] sm:$0xff]
    %v91 = vld [vmem:[%s1 + $0x18] sm:$0xff]
    %v92 = vld [vmem:[%s1 + $0x20] sm:$0xff]
    %v93 = vld [vmem:[%s1 + $0x28] sm:$0xff]
    %v94 = vld [vmem:[%s1 + $0x30] sm:$0xff]
    %v95 = vld [vmem:[%s1 + $0x38] sm:$0xff]
    %v96 = vld [vmem:[%s1 + $0x40] sm:$0xff]
    %v97 = vld [vmem:[%s1 + $0x48] sm:$0xff]
    %v98 = vld [vmem:[%s1 + $0x50] sm:$0xff]
    %v99 = vld [vmem:[%s1 + $0x58] sm:$0xff]
    %v100 = vld [vmem:[%s1 + $0x60] sm:$0xff]
    %v101 = vld [vmem:[%s1 + $0x68] sm:$0xff]
    %v102 = vld [vmem:[%s1 + $0x70] sm:$0xff]
    %v103 = vld [vmem:[%s1 + $0x78] sm:$0xff]
    %v104 = vld [vmem:[%s1 + $0x80] sm:$0xff]
    %v105 = vld [vmem:[%s1 + $0x88] sm:$0xff]
    %v106 = vld [vmem:[%s1 + $0x90] sm:$0xff]
    %v107 = vld [vmem:[%s1 + $0x98] sm:$0xff]
    %v108 = vld [vmem:[%s2] sm:$0x1]
    %v110 = vlaneseq
    %v111 = vshrl.u32 %v110, 7
    %v112 = vsub.s32 0, %v111
    %v113 = vrot.slane %v108, %v112
    %vm115 = vcmask 261120
    %v117 = vsel %vm115, %v25, 0
    %v120 = vsel %vm115, %v27, 0
    %v123 = vsel %vm115, %v29, 0
    %v126 = vsel %vm115, %v31, 0
    %v129 = vsel %vm115, %v33, 0
    %v132 = vsel %vm115, %v35, 0
    %v135 = vsel %vm115, %v37, 0
    %v138 = vsel %vm115, %v39, 0
    %v141 = vsel %vm115, %v41, 0
    %v144 = vsel %vm115, %v43, 0
    %v147 = vsel %vm115, %v45, 0
    %v150 = vsel %vm115, %v47, 0
    %v153 = vsel %vm115, %v49, 0
    %v156 = vsel %vm115, %v51, 0
    %v159 = vsel %vm115, %v53, 0
    %v162 = vsel %vm115, %v55, 0
    %v165 = vsel %vm115, %v57, 0
    %v168 = vsel %vm115, %v59, 0
    %v171 = vsel %vm115, %v61, 0
    %v174 = vsel %vm115, %v63, 0
    %v177 = vsel %vm115, %v65, 0
    %v180 = vsel %vm115, %v67, 0
    %v183 = vsel %vm115, %v69, 0
    %v186 = vsel %vm115, %v71, 0
    %v189 = vsel %vm115, %v73, 0
    %v192 = vsel %vm115, %v75, 0
    %v195 = vsel %vm115, %v77, 0
    %v198 = vsel %vm115, %v79, 0
    %v201 = vsel %vm115, %v81, 0
    %v204 = vsel %vm115, %v83, 0
    %v207 = vsel %vm115, %v85, 0
    %v210 = vsel %vm115, %v87, 0
    %212 = vmatprep.subr.mxu0 0.0
    %213 = vmatpush1.msra.mxu0 %v103
    %214 = vmatprep.subr.mxu0 0.0
    %215 = vmatpush1.msra.mxu0 %v102
    %216 = vmatprep.subr.mxu0 0.0
    %217 = vmatpush1.msra.mxu0 %v101
    %218 = vmatprep.subr.mxu0 0.0
    %219 = vmatpush1.msra.mxu0 %v100
    %220 = vmatprep.subr.mxu0 0.0
    %221 = vmatpush1.msra.mxu0 %v99
    %222 = vmatprep.subr.mxu0 0.0
    %223 = vmatpush1.msra.mxu0 %v98
    %224 = vmatprep.subr.mxu0 0.0
    %225 = vmatpush1.msra.mxu0 %v97
    %226 = vmatprep.subr.mxu0 0.0
    %227 = vmatpush1.msra.mxu0 %v96
    %228 = vmatprep.subr.mxu0 0.0
    %229 = vmatpush1.msra.mxu0 %v95
    %230 = vmatprep.subr.mxu0 0.0
    %231 = vmatpush1.msra.mxu0 %v94
    %232 = vmatprep.subr.mxu0 0.0
    %233 = vmatpush1.msra.mxu0 %v93
    %234 = vmatprep.subr.mxu0 0.0
    %235 = vmatpush1.msra.mxu0 %v92
    %236 = vmatprep.subr.mxu0 0.0
    %237 = vmatpush1.msra.mxu0 %v91
    %238 = vmatprep.subr.mxu0 0.0
    %239 = vmatpush1.msra.mxu0 %v90
    %240 = vmatprep.subr.mxu0 0.0
    %241 = vmatpush1.msra.mxu0 %v89
    %242 = vmatprep.subr.mxu0 0.0
    %243 = vmatpush1.msra.mxu0 %v88
    %244 = vmatprep.subr.mxu0 0.0
    %245 = vmatpush2.msra.mxu0 0.0
    %246 = vmatprep.subr.mxu0 0.0
    %247 = vmatpush2.msra.mxu0 0.0
    %248 = vmatprep.subr.mxu0 0.0
    %249 = vmatpush2.msra.mxu0 0.0
    %250 = vmatprep.subr.mxu0 0.0
    %251 = vmatpush2.msra.mxu0 0.0
    %252 = vmatprep.subr.mxu0 0.0
    %253 = vmatpush2.msra.mxu0 0.0
    %254 = vmatprep.subr.mxu0 0.0
    %255 = vmatpush2.msra.mxu0 0.0
    %256 = vmatprep.subr.mxu0 0.0
    %257 = vmatpush2.msra.mxu0 0.0
    %258 = vmatprep.subr.mxu0 0.0
    %259 = vmatpush2.msra.mxu0 0.0
    %260 = vmatprep.subr.mxu0 0.0
    %261 = vmatpush2.msra.mxu0 0.0
    %262 = vmatprep.subr.mxu0 0.0
    %263 = vmatpush2.msra.mxu0 0.0
    %264 = vmatprep.subr.mxu0 0.0
    %265 = vmatpush2.msra.mxu0 0.0
    %266 = vmatprep.subr.mxu0 0.0
    %267 = vmatpush2.msra.mxu0 0.0
    %268 = vmatprep.subr.mxu0 0.0
    %269 = vmatpush2.msra.mxu0 %v107
    %270 = vmatprep.subr.mxu0 0.0
    %271 = vmatpush2.msra.mxu0 %v106
    %272 = vmatprep.subr.mxu0 0.0
    %273 = vmatpush2.msra.mxu0 %v105
    %274 = vmatprep.subr.mxu0 0.0
    %275 = vmatpush2.msra.mxu0 %v104
    %276 = vmatprep.mubr.f32.mxu0 %v117
    %277 = vmatmul.mubr.f32.gmra.mxu0 %v24
    %v278 = vpop.f32.mrf.mxu0
    %v279 = vadd.f32 %v113, %v278
    %v280 = vpop.f32.mrf.mxu0
    %281 = vmatprep.mubr.f32.mxu0 %v120
    %282 = vmatmul.mubr.f32.gmra.mxu0 %v26
    %v283 = vpop.f32.mrf.mxu0
    %v284 = vadd.f32 %v113, %v283
    %v285 = vpop.f32.mrf.mxu0
    %286 = vmatprep.mubr.f32.mxu0 %v123
    %287 = vmatmul.mubr.f32.gmra.mxu0 %v28
    %v288 = vpop.f32.mrf.mxu0
    %v289 = vadd.f32 %v113, %v288
    %v290 = vpop.f32.mrf.mxu0
    %291 = vmatprep.mubr.f32.mxu0 %v126
    %292 = vmatmul.mubr.f32.gmra.mxu0 %v30
    %v293 = vpop.f32.mrf.mxu0
    %v294 = vadd.f32 %v113, %v293
    %v295 = vpop.f32.mrf.mxu0
    %296 = vmatprep.mubr.f32.mxu0 %v129
    %297 = vmatmul.mubr.f32.gmra.mxu0 %v32
    %v298 = vpop.f32.mrf.mxu0
    %v299 = vadd.f32 %v113, %v298
    %v300 = vpop.f32.mrf.mxu0
    %301 = vmatprep.mubr.f32.mxu0 %v132
    %302 = vmatmul.mubr.f32.gmra.mxu0 %v34
    %v303 = vpop.f32.mrf.mxu0
    %v304 = vadd.f32 %v113, %v303
    %v305 = vpop.f32.mrf.mxu0
    %306 = vmatprep.mubr.f32.mxu0 %v135
    %307 = vmatmul.mubr.f32.gmra.mxu0 %v36
    %v308 = vpop.f32.mrf.mxu0
    %v309 = vadd.f32 %v113, %v308
    %v310 = vpop.f32.mrf.mxu0
    %311 = vmatprep.mubr.f32.mxu0 %v138
    %312 = vmatmul.mubr.f32.gmra.mxu0 %v38
    %v313 = vpop.f32.mrf.mxu0
    %v314 = vadd.f32 %v113, %v313
    %v315 = vpop.f32.mrf.mxu0
    %316 = vmatprep.mubr.f32.mxu0 %v141
    %317 = vmatmul.mubr.f32.gmra.mxu0 %v40
    %v318 = vpop.f32.mrf.mxu0
    %v319 = vadd.f32 %v113, %v318
    %v320 = vpop.f32.mrf.mxu0
    %321 = vmatprep.mubr.f32.mxu0 %v144
    %322 = vmatmul.mubr.f32.gmra.mxu0 %v42
    %v323 = vpop.f32.mrf.mxu0
    %v324 = vadd.f32 %v113, %v323
    %v325 = vpop.f32.mrf.mxu0
    %326 = vmatprep.mubr.f32.mxu0 %v147
    %327 = vmatmul.mubr.f32.gmra.mxu0 %v44
    %v328 = vpop.f32.mrf.mxu0
    %v329 = vadd.f32 %v113, %v328
    %v330 = vpop.f32.mrf.mxu0
    %331 = vmatprep.mubr.f32.mxu0 %v150
    %332 = vmatmul.mubr.f32.gmra.mxu0 %v46
    %v333 = vpop.f32.mrf.mxu0
    %v334 = vadd.f32 %v113, %v333
    %v335 = vpop.f32.mrf.mxu0
    %336 = vmatprep.mubr.f32.mxu0 %v153
    %337 = vmatmul.mubr.f32.gmra.mxu0 %v48
    %v338 = vpop.f32.mrf.mxu0
    %v339 = vadd.f32 %v113, %v338
    %v340 = vpop.f32.mrf.mxu0
    %341 = vmatprep.mubr.f32.mxu0 %v156
    %342 = vmatmul.mubr.f32.gmra.mxu0 %v50
    %v343 = vpop.f32.mrf.mxu0
    %v344 = vadd.f32 %v113, %v343
    %v345 = vpop.f32.mrf.mxu0
    %346 = vmatprep.mubr.f32.mxu0 %v159
    %347 = vmatmul.mubr.f32.gmra.mxu0 %v52
    %v348 = vpop.f32.mrf.mxu0
    %v349 = vadd.f32 %v113, %v348
    %v350 = vpop.f32.mrf.mxu0
    %351 = vmatprep.mubr.f32.mxu0 %v162
    %352 = vmatmul.mubr.f32.gmra.mxu0 %v54
    %v353 = vpop.f32.mrf.mxu0
    %v354 = vadd.f32 %v113, %v353
    %v355 = vpop.f32.mrf.mxu0
    %356 = vmatprep.mubr.f32.mxu0 %v165
    %357 = vmatmul.mubr.f32.gmra.mxu0 %v56
    %v358 = vpop.f32.mrf.mxu0
    %v359 = vadd.f32 %v113, %v358
    %v360 = vpop.f32.mrf.mxu0
    %361 = vmatprep.mubr.f32.mxu0 %v168
    %362 = vmatmul.mubr.f32.gmra.mxu0 %v58
    %v363 = vpop.f32.mrf.mxu0
    %v364 = vadd.f32 %v113, %v363
    %v365 = vpop.f32.mrf.mxu0
    %366 = vmatprep.mubr.f32.mxu0 %v171
    %367 = vmatmul.mubr.f32.gmra.mxu0 %v60
    %v368 = vpop.f32.mrf.mxu0
    %v369 = vadd.f32 %v113, %v368
    %v370 = vpop.f32.mrf.mxu0
    %371 = vmatprep.mubr.f32.mxu0 %v174
    %372 = vmatmul.mubr.f32.gmra.mxu0 %v62
    %v373 = vpop.f32.mrf.mxu0
    %v374 = vadd.f32 %v113, %v373
    %v375 = vpop.f32.mrf.mxu0
    %376 = vmatprep.mubr.f32.mxu0 %v177
    %377 = vmatmul.mubr.f32.gmra.mxu0 %v64
    %v378 = vpop.f32.mrf.mxu0
    %v379 = vadd.f32 %v113, %v378
    %v380 = vpop.f32.mrf.mxu0
    %381 = vmatprep.mubr.f32.mxu0 %v180
    %382 = vmatmul.mubr.f32.gmra.mxu0 %v66
    %v383 = vpop.f32.mrf.mxu0
    %v384 = vadd.f32 %v113, %v383
    %v385 = vpop.f32.mrf.mxu0
    %386 = vmatprep.mubr.f32.mxu0 %v183
    %387 = vmatmul.mubr.f32.gmra.mxu0 %v68
    %v388 = vpop.f32.mrf.mxu0
    %v389 = vadd.f32 %v113, %v388
    %v390 = vpop.f32.mrf.mxu0
    %391 = vmatprep.mubr.f32.mxu0 %v186
    %392 = vmatmul.mubr.f32.gmra.mxu0 %v70
    %v393 = vpop.f32.mrf.mxu0
    %v394 = vadd.f32 %v113, %v393
    %v395 = vpop.f32.mrf.mxu0
    %396 = vmatprep.mubr.f32.mxu0 %v189
    %397 = vmatmul.mubr.f32.gmra.mxu0 %v72
    %v398 = vpop.f32.mrf.mxu0
    %v399 = vadd.f32 %v113, %v398
    %v400 = vpop.f32.mrf.mxu0
    %401 = vmatprep.mubr.f32.mxu0 %v192
    %402 = vmatmul.mubr.f32.gmra.mxu0 %v74
    %v403 = vpop.f32.mrf.mxu0
    %v404 = vadd.f32 %v113, %v403
    %v405 = vpop.f32.mrf.mxu0
    %406 = vmatprep.mubr.f32.mxu0 %v195
    %407 = vmatmul.mubr.f32.gmra.mxu0 %v76
    %v408 = vpop.f32.mrf.mxu0
    %v409 = vadd.f32 %v113, %v408
    %v410 = vpop.f32.mrf.mxu0
    %411 = vmatprep.mubr.f32.mxu0 %v198
    %412 = vmatmul.mubr.f32.gmra.mxu0 %v78
    %v413 = vpop.f32.mrf.mxu0
    %v414 = vadd.f32 %v113, %v413
    %v415 = vpop.f32.mrf.mxu0
    %416 = vmatprep.mubr.f32.mxu0 %v201
    %417 = vmatmul.mubr.f32.gmra.mxu0 %v80
    %v418 = vpop.f32.mrf.mxu0
    %v419 = vadd.f32 %v113, %v418
    %v420 = vpop.f32.mrf.mxu0
    %421 = vmatprep.mubr.f32.mxu0 %v204
    %422 = vmatmul.mubr.f32.gmra.mxu0 %v82
    %v423 = vpop.f32.mrf.mxu0
    %v424 = vadd.f32 %v113, %v423
    %v425 = vpop.f32.mrf.mxu0
    %426 = vmatprep.mubr.f32.mxu0 %v207
    %427 = vmatmul.mubr.f32.gmra.mxu0 %v84
    %v428 = vpop.f32.mrf.mxu0
    %v429 = vadd.f32 %v113, %v428
    %v430 = vpop.f32.mrf.mxu0
    %431 = vmatprep.mubr.f32.mxu0 %v210
    %432 = vmatmul.mubr.f32.gmra.mxu0 %v86
    %v433 = vpop.f32.mrf.mxu0
    %v434 = vadd.f32 %v113, %v433
    %v435 = vpop.f32.mrf.mxu0
    %436 = vdwg.mxu0
    %v437 = vmax.f32 %v279, 0.0
    %v438 = vmax.f32 %v284, 0.0
    %v439 = vmax.f32 %v289, 0.0
    %v440 = vmax.f32 %v294, 0.0
    %v441 = vmax.f32 %v299, 0.0
    %v442 = vmax.f32 %v304, 0.0
    %v443 = vmax.f32 %v309, 0.0
    %v444 = vmax.f32 %v314, 0.0
    %v445 = vmax.f32 %v319, 0.0
    %v446 = vmax.f32 %v324, 0.0
    %v447 = vmax.f32 %v329, 0.0
    %v448 = vmax.f32 %v334, 0.0
    %v449 = vmax.f32 %v339, 0.0
    %v450 = vmax.f32 %v344, 0.0
    %v451 = vmax.f32 %v349, 0.0
    %v452 = vmax.f32 %v354, 0.0
    %v453 = vmax.f32 %v359, 0.0
    %v454 = vmax.f32 %v364, 0.0
    %v455 = vmax.f32 %v369, 0.0
    %v456 = vmax.f32 %v374, 0.0
    %v457 = vmax.f32 %v379, 0.0
    %v458 = vmax.f32 %v384, 0.0
    %v459 = vmax.f32 %v389, 0.0
    %v460 = vmax.f32 %v394, 0.0
    %v461 = vmax.f32 %v399, 0.0
    %v462 = vmax.f32 %v404, 0.0
    %v463 = vmax.f32 %v409, 0.0
    %v464 = vmax.f32 %v414, 0.0
    %v465 = vmax.f32 %v419, 0.0
    %v466 = vmax.f32 %v424, 0.0
    %v467 = vmax.f32 %v429, 0.0
    %v468 = vmax.f32 %v434, 0.0
    %v469 = vld [vmem:[%s3] sm:$0xff]
    %v470 = vld [vmem:[%s3 + $0x8] sm:$0xff]
    %v471 = vmul.f32 %v437, %v469
    %v472 = vmul.f32 %v438, %v470
    %v473 = vmul.f32 %v439, %v469
    %v474 = vmul.f32 %v440, %v470
    %v475 = vmul.f32 %v441, %v469
    %v476 = vmul.f32 %v442, %v470
    %v477 = vmul.f32 %v443, %v469
    %v478 = vmul.f32 %v444, %v470
    %v479 = vmul.f32 %v445, %v469
    %v480 = vmul.f32 %v446, %v470
    %v481 = vmul.f32 %v447, %v469
    %v482 = vmul.f32 %v448, %v470
    %v483 = vmul.f32 %v449, %v469
    %v484 = vmul.f32 %v450, %v470
    %v485 = vmul.f32 %v451, %v469
    %v486 = vmul.f32 %v452, %v470
    %v487 = vmul.f32 %v453, %v469
    %v488 = vmul.f32 %v454, %v470
    %v489 = vmul.f32 %v455, %v469
    %v490 = vmul.f32 %v456, %v470
    %v491 = vmul.f32 %v457, %v469
    %v492 = vmul.f32 %v458, %v470
    %v493 = vmul.f32 %v459, %v469
    %v494 = vmul.f32 %v460, %v470
    %v495 = vmul.f32 %v461, %v469
    %v496 = vmul.f32 %v462, %v470
    %v497 = vmul.f32 %v463, %v469
    %v498 = vmul.f32 %v464, %v470
    %v499 = vmul.f32 %v465, %v469
    %v500 = vmul.f32 %v466, %v470
    %v501 = vmul.f32 %v467, %v469
    %v502 = vmul.f32 %v468, %v470
    %v503 = vmax.f32 %v471, %v472
    %v504 = vrot.slane %v503, 4
    %v505 = vmax.f32 %v503, %v504
    %v506 = vrot.slane %v505, 2
    %v507 = vmax.f32 %v505, %v506
    %v508 = vrot.slane %v507, 1
    %v509 = vmax.f32 %v507, %v508
    %v510 = vmax.f32 %v473, %v474
    %v511 = vrot.slane %v510, 4
    %v512 = vmax.f32 %v510, %v511
    %v513 = vrot.slane %v512, 2
    %v514 = vmax.f32 %v512, %v513
    %v515 = vrot.slane %v514, 1
    %v516 = vmax.f32 %v514, %v515
    %v517 = vmax.f32 %v475, %v476
    %v518 = vrot.slane %v517, 4
    %v519 = vmax.f32 %v517, %v518
    %v520 = vrot.slane %v519, 2
    %v521 = vmax.f32 %v519, %v520
    %v522 = vrot.slane %v521, 1
    %v523 = vmax.f32 %v521, %v522
    %v524 = vmax.f32 %v477, %v478
    %v525 = vrot.slane %v524, 4
    %v526 = vmax.f32 %v524, %v525
    %v527 = vrot.slane %v526, 2
    %v528 = vmax.f32 %v526, %v527
    %v529 = vrot.slane %v528, 1
    %v530 = vmax.f32 %v528, %v529
    %v531 = vmax.f32 %v479, %v480
    %v532 = vrot.slane %v531, 4
    %v533 = vmax.f32 %v531, %v532
    %v534 = vrot.slane %v533, 2
    %v535 = vmax.f32 %v533, %v534
    %v536 = vrot.slane %v535, 1
    %v537 = vmax.f32 %v535, %v536
    %v538 = vmax.f32 %v481, %v482
    %v539 = vrot.slane %v538, 4
    %v540 = vmax.f32 %v538, %v539
    %v541 = vrot.slane %v540, 2
    %v542 = vmax.f32 %v540, %v541
    %v543 = vrot.slane %v542, 1
    %v544 = vmax.f32 %v542, %v543
    %v545 = vmax.f32 %v483, %v484
    %v546 = vrot.slane %v545, 4
    %v547 = vmax.f32 %v545, %v546
    %v548 = vrot.slane %v547, 2
    %v549 = vmax.f32 %v547, %v548
    %v550 = vrot.slane %v549, 1
    %v551 = vmax.f32 %v549, %v550
    %v552 = vmax.f32 %v485, %v486
    %v553 = vrot.slane %v552, 4
    %v554 = vmax.f32 %v552, %v553
    %v555 = vrot.slane %v554, 2
    %v556 = vmax.f32 %v554, %v555
    %v557 = vrot.slane %v556, 1
    %v558 = vmax.f32 %v556, %v557
    %v559 = vmax.f32 %v487, %v488
    %v560 = vrot.slane %v559, 4
    %v561 = vmax.f32 %v559, %v560
    %v562 = vrot.slane %v561, 2
    %v563 = vmax.f32 %v561, %v562
    %v564 = vrot.slane %v563, 1
    %v565 = vmax.f32 %v563, %v564
    %v566 = vmax.f32 %v489, %v490
    %v567 = vrot.slane %v566, 4
    %v568 = vmax.f32 %v566, %v567
    %v569 = vrot.slane %v568, 2
    %v570 = vmax.f32 %v568, %v569
    %v571 = vrot.slane %v570, 1
    %v572 = vmax.f32 %v570, %v571
    %v573 = vmax.f32 %v491, %v492
    %v574 = vrot.slane %v573, 4
    %v575 = vmax.f32 %v573, %v574
    %v576 = vrot.slane %v575, 2
    %v577 = vmax.f32 %v575, %v576
    %v578 = vrot.slane %v577, 1
    %v579 = vmax.f32 %v577, %v578
    %v580 = vmax.f32 %v493, %v494
    %v581 = vrot.slane %v580, 4
    %v582 = vmax.f32 %v580, %v581
    %v583 = vrot.slane %v582, 2
    %v584 = vmax.f32 %v582, %v583
    %v585 = vrot.slane %v584, 1
    %v586 = vmax.f32 %v584, %v585
    %v587 = vmax.f32 %v495, %v496
    %v588 = vrot.slane %v587, 4
    %v589 = vmax.f32 %v587, %v588
    %v590 = vrot.slane %v589, 2
    %v591 = vmax.f32 %v589, %v590
    %v592 = vrot.slane %v591, 1
    %v593 = vmax.f32 %v591, %v592
    %v594 = vmax.f32 %v497, %v498
    %v595 = vrot.slane %v594, 4
    %v596 = vmax.f32 %v594, %v595
    %v597 = vrot.slane %v596, 2
    %v598 = vmax.f32 %v596, %v597
    %v599 = vrot.slane %v598, 1
    %v600 = vmax.f32 %v598, %v599
    %v601 = vmax.f32 %v499, %v500
    %v602 = vrot.slane %v601, 4
    %v603 = vmax.f32 %v601, %v602
    %v604 = vrot.slane %v603, 2
    %v605 = vmax.f32 %v603, %v604
    %v606 = vrot.slane %v605, 1
    %v607 = vmax.f32 %v605, %v606
    %v608 = vmax.f32 %v501, %v502
    %v609 = vrot.slane %v608, 4
    %v610 = vmax.f32 %v608, %v609
    %v611 = vrot.slane %v610, 2
    %v612 = vmax.f32 %v610, %v611
    %v613 = vrot.slane %v612, 1
    %v614 = vmax.f32 %v612, %v613
    %v615 = vld [vmem:[%s4] sm:$0xff]
    %v616 = vld [vmem:[%s4 + $0x8] sm:$0xff]
    %v617 = vld [vmem:[%s4 + $0x10] sm:$0xff]
    %v618 = vld [vmem:[%s4 + $0x18] sm:$0xff]
    %v619 = vld [vmem:[%s4 + $0x20] sm:$0xff]
    %v620 = vld [vmem:[%s4 + $0x28] sm:$0xff]
    %v621 = vld [vmem:[%s4 + $0x30] sm:$0xff]
    %v622 = vld [vmem:[%s4 + $0x38] sm:$0xff]
    %v623 = vld [vmem:[%s4 + $0x40] sm:$0xff]
    %v624 = vld [vmem:[%s4 + $0x48] sm:$0xff]
    %v625 = vld [vmem:[%s4 + $0x50] sm:$0xff]
    %v626 = vld [vmem:[%s4 + $0x58] sm:$0xff]
    %v627 = vld [vmem:[%s4 + $0x60] sm:$0xff]
    %v628 = vld [vmem:[%s4 + $0x68] sm:$0xff]
    %v629 = vld [vmem:[%s4 + $0x70] sm:$0xff]
    %v630 = vld [vmem:[%s4 + $0x78] sm:$0xff]
    %v631 = vld [vmem:[%s5] sm:$0x1]
    %v633 = vlaneseq
    %v634 = vshrl.u32 %v633, 7
    %v635 = vsub.s32 0, %v634
    %v636 = vrot.slane %v631, %v635
    %vm654 = vcmask 1041409
    %v655 = vsel %vm654, %v516, %v509
    %vm656 = vcmask 1042434
    %v657 = vsel %vm656, %v523, %v655
    %vm658 = vcmask 1043459
    %v659 = vsel %vm658, %v530, %v657
    %vm660 = vcmask 1044484
    %v661 = vsel %vm660, %v537, %v659
    %vm662 = vcmask 1045509
    %v663 = vsel %vm662, %v544, %v661
    %vm664 = vcmask 1046534
    %v665 = vsel %vm664, %v551, %v663
    %vm666 = vcmask 1047559
    %v667 = vsel %vm666, %v558, %v665
    %v668 = vsel %vm654, %v572, %v565
    %v669 = vsel %vm656, %v579, %v668
    %v670 = vsel %vm658, %v586, %v669
    %v671 = vsel %vm660, %v593, %v670
    %v672 = vsel %vm662, %v600, %v671
    %v673 = vsel %vm664, %v607, %v672
    %v674 = vsel %vm666, %v614, %v673
    %677 = vmatprep.subr.mxu0 0.0
    %678 = vmatpush1.msra.mxu0 %v630
    %679 = vmatprep.subr.mxu0 0.0
    %680 = vmatpush1.msra.mxu0 %v629
    %681 = vmatprep.subr.mxu0 0.0
    %682 = vmatpush1.msra.mxu0 %v628
    %683 = vmatprep.subr.mxu0 0.0
    %684 = vmatpush1.msra.mxu0 %v627
    %685 = vmatprep.subr.mxu0 0.0
    %686 = vmatpush1.msra.mxu0 %v626
    %687 = vmatprep.subr.mxu0 0.0
    %688 = vmatpush1.msra.mxu0 %v625
    %689 = vmatprep.subr.mxu0 0.0
    %690 = vmatpush1.msra.mxu0 %v624
    %691 = vmatprep.subr.mxu0 0.0
    %692 = vmatpush1.msra.mxu0 %v623
    %693 = vmatprep.subr.mxu0 0.0
    %694 = vmatpush1.msra.mxu0 %v622
    %695 = vmatprep.subr.mxu0 0.0
    %696 = vmatpush1.msra.mxu0 %v621
    %697 = vmatprep.subr.mxu0 0.0
    %698 = vmatpush1.msra.mxu0 %v620
    %699 = vmatprep.subr.mxu0 0.0
    %700 = vmatpush1.msra.mxu0 %v619
    %701 = vmatprep.subr.mxu0 0.0
    %702 = vmatpush1.msra.mxu0 %v618
    %703 = vmatprep.subr.mxu0 0.0
    %704 = vmatpush1.msra.mxu0 %v617
    %705 = vmatprep.subr.mxu0 0.0
    %706 = vmatpush1.msra.mxu0 %v616
    %707 = vmatprep.subr.mxu0 0.0
    %708 = vmatpush1.msra.mxu0 %v615
    %709 = vmatprep.subr.mxu0 0.0
    %710 = vmatpush2.msra.mxu0 0.0
    %711 = vmatprep.subr.mxu0 0.0
    %712 = vmatpush2.msra.mxu0 0.0
    %713 = vmatprep.subr.mxu0 0.0
    %714 = vmatpush2.msra.mxu0 0.0
    %715 = vmatprep.subr.mxu0 0.0
    %716 = vmatpush2.msra.mxu0 0.0
    %717 = vmatprep.subr.mxu0 0.0
    %718 = vmatpush2.msra.mxu0 0.0
    %719 = vmatprep.subr.mxu0 0.0
    %720 = vmatpush2.msra.mxu0 0.0
    %721 = vmatprep.subr.mxu0 0.0
    %722 = vmatpush2.msra.mxu0 0.0
    %723 = vmatprep.subr.mxu0 0.0
    %724 = vmatpush2.msra.mxu0 0.0
    %725 = vmatprep.subr.mxu0 0.0
    %726 = vmatpush2.msra.mxu0 0.0
    %727 = vmatprep.subr.mxu0 0.0
    %728 = vmatpush2.msra.mxu0 0.0
    %729 = vmatprep.subr.mxu0 0.0
    %730 = vmatpush2.msra.mxu0 0.0
    %731 = vmatprep.subr.mxu0 0.0
    %732 = vmatpush2.msra.mxu0 0.0
    %733 = vmatprep.subr.mxu0 0.0
    %734 = vmatpush2.msra.mxu0 0.0
    %735 = vmatprep.subr.mxu0 0.0
    %736 = vmatpush2.msra.mxu0 0.0
    %737 = vmatprep.subr.mxu0 0.0
    %738 = vmatpush2.msra.mxu0 0.0
    %739 = vmatprep.subr.mxu0 0.0
    %740 = vmatpush2.msra.mxu0 0.0
    %741 = vmatprep.mubr.f32.mxu0 0.0
    %742 = vmatmul.mubr.f32.gmra.mxu0 %v667
    %v743 = vpop.f32.mrf.mxu0
    %v744 = vadd.f32 %v636, %v743
    %v745 = vpop.f32.mrf.mxu0
    %746 = vmatprep.mubr.f32.mxu0 0.0
    %747 = vmatmul.mubr.f32.gmra.mxu0 %v674
    %v748 = vpop.f32.mrf.mxu0
    %v749 = vadd.f32 %v636, %v748
    %v750 = vpop.f32.mrf.mxu0
    %751 = vdwg.mxu0
    %752 = vmax.xlane.f32.xlu0 %v744
    %v753 = vpop.xlane.xlu0 %752
    %754 = vmax.xlane.f32.xlu0 %v749
    %v755 = vpop.xlane.xlu0 %754
    %v756 = vsub.f32 %v744, %v753
    %v757 = vsub.f32 %v749, %v755
    %v758 = vmul.f32 %v756, 1.442695
    %v759 = vpow.pop %v758
    %v760 = vmul.f32 %v757, 1.442695
    %v761 = vpow.pop %v760
    %762 = vadd.xlane.f32.xlu0 %v759
    %v763 = vpop.xlane.xlu0 %762
    %764 = vadd.xlane.f32.xlu0 %v761
    %v765 = vpop.xlane.xlu0 %764
    %v766 = vrcp.pop %v763
    %v767 = vrcp.pop %v765
    %v768 = vmul.f32 %v759, %v766
    %v769 = vmul.f32 %v761, %v767
    %770 = vst [vmem:[#allocation2] sm:$0xff] %v768
    %771 = vst [vmem:[#allocation2 + $0x8] sm:$0xff] %v769
    // Predicated region
    $region26: #{tpu_custom_call.1} parent=1 // pred_check
      _
    $region27: #{tpu_custom_call.1} parent=1 // pred_check_branch
      %773 = sbr.rel (0) target = $region29
    $region28: #{tpu_custom_call.1} parent=1 // pred_region
      %s775 = ssub.s32 256, 256
      %776 = vsyncadd [#allocation3], %s775
      %s777 = sshll.u32 [#allocation2], 4
      %s778 = int_to_ptr.vmem [resolvable:$true] %s777
      %783 = dma.vmem_to_hbm [thread:$0]  %s778, 256, %s6, [#allocation3], 128, 128, 8
    $region29: #{tpu_custom_call.1} parent=1 // pred_fallthru
      _
    // Predicated region
    $region30: #{tpu_custom_call.1} parent=1 // pred_check
      _
    $region31: #{tpu_custom_call.1} parent=1 // pred_check_branch
      %785 = sbr.rel (0) target = $region33
    $region32: #{tpu_custom_call.1} parent=1 // pred_region
      %786 = dma.done [#allocation3], 256
    $region33: #{tpu_custom_call.1} parent=1 // pred_fallthru
      _
    %787 = vsyncpa [#allocation3], 1

</llo_original>
